<compile_context>
chip_gen: v7x
topology: tpu7x:2x2x1
jax: 0.10.0
libtpu: 0.0.40
codegen_flags: <defaults>
</compile_context>

<pallas_src>
import functools

import jax
import jax.numpy as jnp
from jax import lax
from jax.experimental import pallas as pl
from jax.experimental.pallas import tpu as pltpu

BN_EPS = 1e-5
SUBLANE = 8


def _round_up(x, m):
    return ((x + m - 1) // m) * m


def _resident_spec(block_shape, index_map):
    """BlockSpec for an operand whose block never changes (single-buffered)."""
    try:
        return pl.BlockSpec(block_shape, index_map, pipeline_mode=pl.Buffered(1))
    except TypeError:  # older jax without pipeline_mode: default buffering
        return pl.BlockSpec(block_shape, index_map)


# ---------------------------------------------------------------------------
# Pass 1: streaming full-batch BN statistics -> fused scale/shift vectors.
#   phase 0: accumulate sum / sum-sq of h1 = x @ W1^T
#   phase 1: accumulate sum / sum-sq of h2 = relu(bn1(h1)) @ W2^T (row-masked
#            on the last tile only)
# stats output rows: 0 scale1, 1 shift1, 2 scale2, 3 shift2 (4..7 zero).
# ---------------------------------------------------------------------------
def _stats_kernel(x_ref, w1t_ref, w2t_ref, bnp_ref, stats_ref, acc_ref,
                  *, n_true, tm, valid_last):
    phase = pl.program_id(0)
    t = pl.program_id(1)
    last_t = pl.num_programs(1) - 1
    inv_n = 1.0 / float(n_true)

    @pl.when((phase == 0) & (t == 0))
    def _():
        acc_ref[...] = jnp.zeros_like(acc_ref)
        stats_ref[...] = jnp.zeros_like(stats_ref)

    x = x_ref[...].astype(jnp.float32)
    h1 = jnp.dot(x, w1t_ref[...], preferred_element_type=jnp.float32)

    @pl.when(phase == 0)
    def _():
        # Zero-padded rows of x give zero rows of h1 -> no masking needed here.
        acc_ref[0:1, :] += jnp.sum(h1, axis=0, keepdims=True)
        acc_ref[1:2, :] += jnp.sum(h1 * h1, axis=0, keepdims=True)

        @pl.when(t == last_t)
        def _():
            mean1 = acc_ref[0:1, :] * inv_n
            var1 = acc_ref[1:2, :] * inv_n - mean1 * mean1       # biased var
            scale1 = lax.rsqrt(var1 + BN_EPS) * bnp_ref[0:1, :]  # EUP rsqrt
            stats_ref[0:1, :] = scale1
            stats_ref[1:2, :] = bnp_ref[1:2, :] - mean1 * scale1

    @pl.when(phase == 1)
    def _():
        a1 = jnp.maximum(h1 * stats_ref[0:1, :] + stats_ref[1:2, :], 0.0)
        h2 = jnp.dot(a1, w2t_ref[...], preferred_element_type=jnp.float32)

        def accum(hv):
            acc_ref[2:3, :] += jnp.sum(hv, axis=0, keepdims=True)
            acc_ref[3:4, :] += jnp.sum(hv * hv, axis=0, keepdims=True)

        if valid_last < tm:
            # Padded rows only ever live in the last tile; mask there only.
            @pl.when(t == last_t)
            def _():
                row = lax.broadcasted_iota(jnp.int32, (tm, 1), 0)
                accum(jnp.where(row < valid_last, h2, 0.0))

            @pl.when(t != last_t)
            def _():
                accum(h2)
        else:
            accum(h2)

        @pl.when(t == last_t)
        def _():
            mean2 = acc_ref[2:3, :] * inv_n
            var2 = acc_ref[3:4, :] * inv_n - mean2 * mean2
            scale2 = lax.rsqrt(var2 + BN_EPS) * bnp_ref[2:3, :]
            stats_ref[2:3, :] = scale2
            stats_ref[3:4, :] = bnp_ref[3:4, :] - mean2 * scale2


# ---------------------------------------------------------------------------
# Pass 2: pure per-tile map (no cross-tile state) -> tile axis "parallel".
# ---------------------------------------------------------------------------
def _output_kernel(x_ref, w1t_ref, w2t_ref, stats_ref, o_ref):
    x = x_ref[...].astype(jnp.float32)
    h1 = jnp.dot(x, w1t_ref[...], preferred_element_type=jnp.float32)
    a1 = jnp.maximum(h1 * stats_ref[0:1, :] + stats_ref[1:2, :], 0.0)
    h2 = jnp.dot(a1, w2t_ref[...], preferred_element_type=jnp.float32)
    o_ref[...] = (h2 * stats_ref[2:3, :] + stats_ref[3:4, :] + x).astype(o_ref.dtype)


def conv_bn_relu_res_1d(x, w1, w2, g1, b1, g2, b2, *, block_rows=1024):
    """pointmlp ConvBNReLURes1D forward (training-mode BN, bias-free linears).

    x: (N, F); w1, w2: (F, F) in PyTorch (out_features, in_features)
    convention; g*/b*: (F,) BatchNorm affine parameters.
    """
    n, f = x.shape

    # Generation-aware VMEM budget (v7x: 64 MiB physical; v5e/v6e: 128 MiB).
    try:
        vmem_cap = int(pltpu.get_tpu_info().vmem_capacity_bytes)
    except Exception:
        vmem_cap = 64 * 1024 * 1024
    vmem_budget = min((vmem_cap * 3) // 4, 100 * 1024 * 1024)

    # Resident, single-buffered operands: W1^T, W2^T, BN params, stats (+acc).
    resident_bytes = (2 * f * f + 4 * f + 3 * 8 * f) * 4
    # Per row: double-buffered x and out tiles + ~3 f32 temps (h1/a1/h2).
    per_row_bytes = (2 * 2 * f + 3 * f) * 4
    tm_cap = max(SUBLANE, (vmem_budget - resident_bytes) // per_row_bytes)
    tm = min(_round_up(block_rows, SUBLANE), _round_up(n, SUBLANE),
             max(SUBLANE, (tm_cap // SUBLANE) * SUBLANE))
    np_ = _round_up(n, tm)
    n_tiles = np_ // tm
    valid_last = n - (n_tiles - 1) * tm

    # Weights pre-transposed once; BN affine params packed into one array.
    # (In production these would be stored transposed/packed at init.)
    w1t = w1.T.astype(jnp.float32)
    w2t = w2.T.astype(jnp.float32)
    bnp = jnp.stack([g1, b1, g2, b2]).astype(jnp.float32)          # (4, F)

    # Rows padded only when N is not a multiple of the tile; features never.
    xp = x if np_ == n else jnp.zeros((np_, f), x.dtype).at[:n, :].set(x)

    stats_cost = pl.CostEstimate(
        flops=3 * 2 * np_ * f * f + 10 * np_ * f,
        transcendentals=2 * f,
        bytes_accessed=(2 * np_ * f + 2 * f * f + 4 * f + 8 * f) * 4)
    out_cost = pl.CostEstimate(
        flops=2 * 2 * np_ * f * f + 6 * np_ * f,
        transcendentals=0,
        bytes_accessed=(2 * np_ * f + 2 * f * f + 8 * f) * 4)

    stats = pl.pallas_call(
        functools.partial(_stats_kernel, n_true=n, tm=tm, valid_last=valid_last),
        out_shape=jax.ShapeDtypeStruct((8, f), jnp.float32),
        grid=(2, n_tiles),                                  # (phase, row tile)
        in_specs=[
            pl.BlockSpec((tm, f), lambda p, t: (t, 0)),     # x tile (pipelined)
            _resident_spec((f, f), lambda p, t: (0, 0)),    # W1^T
            _resident_spec((f, f), lambda p, t: (0, 0)),    # W2^T
            _resident_spec((4, f), lambda p, t: (0, 0)),    # packed BN params
        ],
        # Constant index map -> stats block stays resident in VMEM and is
        # written back to HBM exactly once at the end of the grid.
        out_specs=pl.BlockSpec((8, f), lambda p, t: (0, 0)),
        scratch_shapes=[pltpu.VMEM((8, f), jnp.float32)],   # packed sum/sum-sq
        compiler_params=pltpu.CompilerParams(
            dimension_semantics=("arbitrary", "arbitrary"),
            vmem_limit_bytes=vmem_budget),
        cost_estimate=stats_cost,
    )(xp, w1t, w2t, bnp)

    out = pl.pallas_call(
        _output_kernel,
        out_shape=jax.ShapeDtypeStruct((np_, f), x.dtype),
        grid=(n_tiles,),
        in_specs=[
            pl.BlockSpec((tm, f), lambda t: (t, 0)),        # x tile
            _resident_spec((f, f), lambda t: (0, 0)),       # W1^T
            _resident_spec((f, f), lambda t: (0, 0)),       # W2^T
            _resident_spec((8, f), lambda t: (0, 0)),       # fused scale/shift
        ],
        out_specs=pl.BlockSpec((tm, f), lambda t: (t, 0)),
        compiler_params=pltpu.CompilerParams(
            dimension_semantics=("parallel",),              # v7x: both TCs
            vmem_limit_bytes=vmem_budget),
        cost_estimate=out_cost,
    )(xp, w1t, w2t, stats)

    return out if np_ == n else out[:n, :]


def reference_jax(x, w1, w2, g1, b1, g2, b2):
    def bn(h, g, b):
        m = h.mean(0, keepdims=True)
        v = ((h - m) ** 2).mean(0, keepdims=True)
        return (h - m) / jnp.sqrt(v + BN_EPS) * g + b

    h = x @ w1.T
    h = jnp.maximum(bn(h, g1, b1), 0.0)
    h = h @ w2.T
    return bn(h, g2, b2) + x


if __name__ == "__main__":
    num_features = 32
    batch = 16

    key = jax.random.PRNGKey(0)
    kx, kw1, kw2 = jax.random.split(key, 3)

    x = jax.random.normal(kx, (batch, num_features), dtype=jnp.float32)
    bound = 1.0 / float(num_features) ** 0.5
    w1 = jax.random.uniform(kw1, (num_features, num_features),
                            minval=-bound, maxval=bound, dtype=jnp.float32)
    w2 = jax.random.uniform(kw2, (num_features, num_features),
                            minval=-bound, maxval=bound, dtype=jnp.float32)
    g1 = jnp.linspace(0.5, 1.5, num_features, dtype=jnp.float32)
    b1 = jnp.linspace(-0.2, 0.2, num_features, dtype=jnp.float32)
    g2 = jnp.linspace(1.2, 0.8, num_features, dtype=jnp.float32)
    b2 = jnp.linspace(0.1, -0.1, num_features, dtype=jnp.float32)

    out = jax.block_until_ready(conv_bn_relu_res_1d(x, w1, w2, g1, b1, g2, b2))
    ref = reference_jax(x, w1, w2, g1, b1, g2, b2)
    assert out.shape == (batch, num_features)
    assert jnp.allclose(out, ref, atol=1e-4, rtol=1e-4), \
        "mismatch vs reference (single tile)"

    # Also exercise the multi-tile / row-padded path (streaming BN statistics).
    batch2 = 300
    x2 = jax.random.normal(jax.random.PRNGKey(1), (batch2, num_features),
                           dtype=jnp.float32)
    out2 = jax.block_until_ready(
        conv_bn_relu_res_1d(x2, w1, w2, g1, b1, g2, b2, block_rows=128))
    ref2 = reference_jax(x2, w1, w2, g1, b1, g2, b2)
    assert out2.shape == (batch2, num_features)
    assert jnp.allclose(out2, ref2, atol=1e-4, rtol=1e-4), \
        "mismatch vs reference (multi tile)"

    print("KERNEL_OK")
</pallas_src>

<mosaic_0001>
module attributes {stable_mosaic.version = 11 : i64} {
  func.func @_stats_kernel(%arg0: i32, %arg1: i32, %arg2: memref<16x32xf32, #tpu.memory_space<vmem>>, %arg3: memref<32x32xf32, #tpu.memory_space<vmem>>, %arg4: memref<32x32xf32, #tpu.memory_space<vmem>>, %arg5: memref<4x32xf32, #tpu.memory_space<vmem>>, %arg6: memref<8x32xf32, #tpu.memory_space<vmem>>, %arg7: memref<8x32xf32, #tpu.memory_space<vmem>>) attributes {dimension_semantics = [#tpu.dimension_semantics<arbitrary>, #tpu.dimension_semantics<arbitrary>], iteration_bounds = array<i64: 2, 1>, scalar_prefetch = 0 : i64, scratch_operands = 1 : i64, tpu.core_type = #tpu.core_type<tc>, window_params = [{transform_indices = @transform_0, window_bounds = array<i64: 16, 32>}, {pipeline_mode = #tpu.pipeline_mode<synchronous>, transform_indices = @transform_1, window_bounds = array<i64: 32, 32>}, {pipeline_mode = #tpu.pipeline_mode<synchronous>, transform_indices = @transform_2, window_bounds = array<i64: 32, 32>}, {pipeline_mode = #tpu.pipeline_mode<synchronous>, transform_indices = @transform_3, window_bounds = array<i64: 4, 32>}, {pipeline_mode = #tpu.pipeline_mode<synchronous>, transform_indices = @transform_4, window_bounds = array<i64: 8, 32>}]} {
    %c0_i32 = arith.constant 0 : i32
    %0 = arith.cmpi eq, %arg0, %c0_i32 : i32
    %c0_i32_0 = arith.constant 0 : i32
    %1 = arith.cmpi eq, %arg1, %c0_i32_0 : i32
    %2 = arith.andi %0, %1 : i1
    %3 = arith.extui %2 : i1 to i32
    %c0_i32_1 = arith.constant 0 : i32
    %4 = arith.cmpi ne, %3, %c0_i32_1 : i32
    scf.if %4 {
      %cst_8 = arith.constant 0.000000e+00 : f32
      %14 = vector.broadcast %cst_8 : f32 to vector<8x32xf32>
      %c0_9 = arith.constant 0 : index
      %c0_10 = arith.constant 0 : index
      %15 = vector.load %arg7[%c0_9, %c0_10] : memref<8x32xf32, #tpu.memory_space<vmem>>, vector<8x32xf32>
      tpu.vector_store %arg7[%c0_9, %c0_10], %14 {strides = array<i32>} : memref<8x32xf32, #tpu.memory_space<vmem>>, vector<8x32xf32>,
      %cst_11 = arith.constant 0.000000e+00 : f32
      %16 = vector.broadcast %cst_11 : f32 to vector<8x32xf32>
      %c0_12 = arith.constant 0 : index
      %c0_13 = arith.constant 0 : index
      %17 = vector.load %arg6[%c0_12, %c0_13] : memref<8x32xf32, #tpu.memory_space<vmem>>, vector<8x32xf32>
      tpu.vector_store %arg6[%c0_12, %c0_13], %16 {strides = array<i32>} : memref<8x32xf32, #tpu.memory_space<vmem>>, vector<8x32xf32>,
    } else {
    }
    %c0 = arith.constant 0 : index
    %c0_2 = arith.constant 0 : index
    %5 = vector.load %arg2[%c0, %c0_2] : memref<16x32xf32, #tpu.memory_space<vmem>>, vector<16x32xf32>
    %c0_3 = arith.constant 0 : index
    %c0_4 = arith.constant 0 : index
    %6 = vector.load %arg3[%c0_3, %c0_4] : memref<32x32xf32, #tpu.memory_space<vmem>>, vector<32x32xf32>
    %cst = arith.constant dense<0.000000e+00> : vector<16x32xf32>
    %7 = tpu.matmul %5, %6, %cst {dimension_numbers = #tpu.dot_dimension_numbers<[1], [0], [0], [1], [0, 0, 1, 1], [], []>} : vector<16x32xf32>, vector<32x32xf32>, vector<16x32xf32> -> vector<16x32xf32>
    %c0_i32_5 = arith.constant 0 : i32
    %8 = arith.cmpi eq, %arg0, %c0_i32_5 : i32
    %9 = arith.extui %8 : i1 to i32
    %c0_i32_6 = arith.constant 0 : i32
    %10 = arith.cmpi ne, %9, %c0_i32_6 : i32
    scf.if %10 {
      %c0_8 = arith.constant 0 : index
      %c0_9 = arith.constant 0 : index
      %14 = vector.load %arg7[%c0_8, %c0_9] : memref<8x32xf32, #tpu.memory_space<vmem>>, vector<1x32xf32>
      %cst_10 = arith.constant dense<0.000000e+00> : vector<32xf32>
      %15 = vector.multi_reduction <add>, %7, %cst_10 [0] : vector<16x32xf32> to vector<32xf32>
      %16 = vector.shape_cast %15 : vector<32xf32> to vector<1x32xf32>
      %17 = arith.addf %14, %16 : vector<1x32xf32>
      %c0_11 = arith.constant 0 : index
      %c0_12 = arith.constant 0 : index
      %18 = vector.load %arg7[%c0_11, %c0_12] : memref<8x32xf32, #tpu.memory_space<vmem>>, vector<1x32xf32>
      tpu.vector_store %arg7[%c0_11, %c0_12], %17 {strides = array<i32>} : memref<8x32xf32, #tpu.memory_space<vmem>>, vector<1x32xf32>,
      %c1 = arith.constant 1 : index
      %c0_13 = arith.constant 0 : index
      %19 = vector.load %arg7[%c1, %c0_13] : memref<8x32xf32, #tpu.memory_space<vmem>>, vector<1x32xf32>
      %20 = arith.mulf %7, %7 : vector<16x32xf32>
      %cst_14 = arith.constant dense<0.000000e+00> : vector<32xf32>
      %21 = vector.multi_reduction <add>, %20, %cst_14 [0] : vector<16x32xf32> to vector<32xf32>
      %22 = vector.shape_cast %21 : vector<32xf32> to vector<1x32xf32>
      %23 = arith.addf %19, %22 : vector<1x32xf32>
      %c1_15 = arith.constant 1 : index
      %c0_16 = arith.constant 0 : index
      %24 = vector.load %arg7[%c1_15, %c0_16] : memref<8x32xf32, #tpu.memory_space<vmem>>, vector<1x32xf32>
      tpu.vector_store %arg7[%c1_15, %c0_16], %23 {strides = array<i32>} : memref<8x32xf32, #tpu.memory_space<vmem>>, vector<1x32xf32>,
      %c0_i32_17 = arith.constant 0 : i32
      %25 = arith.cmpi eq, %arg1, %c0_i32_17 : i32
      %26 = arith.extui %25 : i1 to i32
      %c0_i32_18 = arith.constant 0 : i32
      %27 = arith.cmpi ne, %26, %c0_i32_18 : i32
      scf.if %27 {
        %c0_19 = arith.constant 0 : index
        %c0_20 = arith.constant 0 : index
        %28 = vector.load %arg7[%c0_19, %c0_20] : memref<8x32xf32, #tpu.memory_space<vmem>>, vector<1x32xf32>
        %cst_21 = arith.constant 6.250000e-02 : f32
        %29 = vector.broadcast %cst_21 : f32 to vector<1x32xf32>
        %30 = arith.mulf %28, %29 : vector<1x32xf32>
        %c1_22 = arith.constant 1 : index
        %c0_23 = arith.constant 0 : index
        %31 = vector.load %arg7[%c1_22, %c0_23] : memref<8x32xf32, #tpu.memory_space<vmem>>, vector<1x32xf32>
        %cst_24 = arith.constant 6.250000e-02 : f32
        %32 = vector.broadcast %cst_24 : f32 to vector<1x32xf32>
        %33 = arith.mulf %31, %32 : vector<1x32xf32>
        %34 = arith.mulf %30, %30 : vector<1x32xf32>
        %35 = arith.subf %33, %34 : vector<1x32xf32>
        %cst_25 = arith.constant 9.99999974E-6 : f32
        %36 = vector.broadcast %cst_25 : f32 to vector<1x32xf32>
        %37 = arith.addf %35, %36 : vector<1x32xf32>
        %38 = math.rsqrt %37 : vector<1x32xf32>
        %c0_26 = arith.constant 0 : index
        %c0_27 = arith.constant 0 : index
        %39 = vector.load %arg5[%c0_26, %c0_27] : memref<4x32xf32, #tpu.memory_space<vmem>>, vector<1x32xf32>
        %40 = arith.mulf %38, %39 : vector<1x32xf32>
        %c0_28 = arith.constant 0 : index
        %c0_29 = arith.constant 0 : index
        %41 = vector.load %arg6[%c0_28, %c0_29] : memref<8x32xf32, #tpu.memory_space<vmem>>, vector<1x32xf32>
        tpu.vector_store %arg6[%c0_28, %c0_29], %40 {strides = array<i32>} : memref<8x32xf32, #tpu.memory_space<vmem>>, vector<1x32xf32>,
        %c1_30 = arith.constant 1 : index
        %c0_31 = arith.constant 0 : index
        %42 = vector.load %arg5[%c1_30, %c0_31] : memref<4x32xf32, #tpu.memory_space<vmem>>, vector<1x32xf32>
        %43 = arith.mulf %30, %40 : vector<1x32xf32>
        %44 = arith.subf %42, %43 : vector<1x32xf32>
        %c1_32 = arith.constant 1 : index
        %c0_33 = arith.constant 0 : index
        %45 = vector.load %arg6[%c1_32, %c0_33] : memref<8x32xf32, #tpu.memory_space<vmem>>, vector<1x32xf32>
        tpu.vector_store %arg6[%c1_32, %c0_33], %44 {strides = array<i32>} : memref<8x32xf32, #tpu.memory_space<vmem>>, vector<1x32xf32>,
      } else {
      }
    } else {
    }
    %c1_i32 = arith.constant 1 : i32
    %11 = arith.cmpi eq, %arg0, %c1_i32 : i32
    %12 = arith.extui %11 : i1 to i32
    %c0_i32_7 = arith.constant 0 : i32
    %13 = arith.cmpi ne, %12, %c0_i32_7 : i32
    scf.if %13 {
      %c0_8 = arith.constant 0 : index
      %c0_9 = arith.constant 0 : index
      %14 = vector.load %arg6[%c0_8, %c0_9] : memref<8x32xf32, #tpu.memory_space<vmem>>, vector<1x32xf32>
      %15 = vector.broadcast %14 : vector<1x32xf32> to vector<16x32xf32>
      %16 = arith.mulf %7, %15 : vector<16x32xf32>
      %c1 = arith.constant 1 : index
      %c0_10 = arith.constant 0 : index
      %17 = vector.load %arg6[%c1, %c0_10] : memref<8x32xf32, #tpu.memory_space<vmem>>, vector<1x32xf32>
      %18 = vector.broadcast %17 : vector<1x32xf32> to vector<16x32xf32>
      %19 = arith.addf %16, %18 : vector<16x32xf32>
      %cst_11 = arith.constant 0.000000e+00 : f32
      %20 = vector.broadcast %cst_11 : f32 to vector<16x32xf32>
      %21 = arith.maximumf %19, %20 : vector<16x32xf32>
      %c0_12 = arith.constant 0 : index
      %c0_13 = arith.constant 0 : index
      %22 = vector.load %arg4[%c0_12, %c0_13] : memref<32x32xf32, #tpu.memory_space<vmem>>, vector<32x32xf32>
      %cst_14 = arith.constant dense<0.000000e+00> : vector<16x32xf32>
      %23 = tpu.matmul %21, %22, %cst_14 {dimension_numbers = #tpu.dot_dimension_numbers<[1], [0], [0], [1], [0, 0, 1, 1], [], []>} : vector<16x32xf32>, vector<32x32xf32>, vector<16x32xf32> -> vector<16x32xf32>
      %c2 = arith.constant 2 : index
      %c0_15 = arith.constant 0 : index
      %24 = vector.load %arg7[%c2, %c0_15] : memref<8x32xf32, #tpu.memory_space<vmem>>, vector<1x32xf32>
      %cst_16 = arith.constant dense<0.000000e+00> : vector<32xf32>
      %25 = vector.multi_reduction <add>, %23, %cst_16 [0] : vector<16x32xf32> to vector<32xf32>
      %26 = vector.shape_cast %25 : vector<32xf32> to vector<1x32xf32>
      %27 = arith.addf %24, %26 : vector<1x32xf32>
      %c2_17 = arith.constant 2 : index
      %c0_18 = arith.constant 0 : index
      %28 = vector.load %arg7[%c2_17, %c0_18] : memref<8x32xf32, #tpu.memory_space<vmem>>, vector<1x32xf32>
      tpu.vector_store %arg7[%c2_17, %c0_18], %27 {strides = array<i32>} : memref<8x32xf32, #tpu.memory_space<vmem>>, vector<1x32xf32>,
      %c3 = arith.constant 3 : index
      %c0_19 = arith.constant 0 : index
      %29 = vector.load %arg7[%c3, %c0_19] : memref<8x32xf32, #tpu.memory_space<vmem>>, vector<1x32xf32>
      %30 = arith.mulf %23, %23 : vector<16x32xf32>
      %cst_20 = arith.constant dense<0.000000e+00> : vector<32xf32>
      %31 = vector.multi_reduction <add>, %30, %cst_20 [0] : vector<16x32xf32> to vector<32xf32>
      %32 = vector.shape_cast %31 : vector<32xf32> to vector<1x32xf32>
      %33 = arith.addf %29, %32 : vector<1x32xf32>
      %c3_21 = arith.constant 3 : index
      %c0_22 = arith.constant 0 : index
      %34 = vector.load %arg7[%c3_21, %c0_22] : memref<8x32xf32, #tpu.memory_space<vmem>>, vector<1x32xf32>
      tpu.vector_store %arg7[%c3_21, %c0_22], %33 {strides = array<i32>} : memref<8x32xf32, #tpu.memory_space<vmem>>, vector<1x32xf32>,
      %c0_i32_23 = arith.constant 0 : i32
      %35 = arith.cmpi eq, %arg1, %c0_i32_23 : i32
      %36 = arith.extui %35 : i1 to i32
      %c0_i32_24 = arith.constant 0 : i32
      %37 = arith.cmpi ne, %36, %c0_i32_24 : i32
      scf.if %37 {
        %c2_25 = arith.constant 2 : index
        %c0_26 = arith.constant 0 : index
        %38 = vector.load %arg7[%c2_25, %c0_26] : memref<8x32xf32, #tpu.memory_space<vmem>>, vector<1x32xf32>
        %cst_27 = arith.constant 6.250000e-02 : f32
        %39 = vector.broadcast %cst_27 : f32 to vector<1x32xf32>
        %40 = arith.mulf %38, %39 : vector<1x32xf32>
        %c3_28 = arith.constant 3 : index
        %c0_29 = arith.constant 0 : index
        %41 = vector.load %arg7[%c3_28, %c0_29] : memref<8x32xf32, #tpu.memory_space<vmem>>, vector<1x32xf32>
        %cst_30 = arith.constant 6.250000e-02 : f32
        %42 = vector.broadcast %cst_30 : f32 to vector<1x32xf32>
        %43 = arith.mulf %41, %42 : vector<1x32xf32>
        %44 = arith.mulf %40, %40 : vector<1x32xf32>
        %45 = arith.subf %43, %44 : vector<1x32xf32>
        %cst_31 = arith.constant 9.99999974E-6 : f32
        %46 = vector.broadcast %cst_31 : f32 to vector<1x32xf32>
        %47 = arith.addf %45, %46 : vector<1x32xf32>
        %48 = math.rsqrt %47 : vector<1x32xf32>
        %c2_32 = arith.constant 2 : index
        %c0_33 = arith.constant 0 : index
        %49 = vector.load %arg5[%c2_32, %c0_33] : memref<4x32xf32, #tpu.memory_space<vmem>>, vector<1x32xf32>
        %50 = arith.mulf %48, %49 : vector<1x32xf32>
        %c2_34 = arith.constant 2 : index
        %c0_35 = arith.constant 0 : index
        %51 = vector.load %arg6[%c2_34, %c0_35] : memref<8x32xf32, #tpu.memory_space<vmem>>, vector<1x32xf32>
        tpu.vector_store %arg6[%c2_34, %c0_35], %50 {strides = array<i32>} : memref<8x32xf32, #tpu.memory_space<vmem>>, vector<1x32xf32>,
        %c3_36 = arith.constant 3 : index
        %c0_37 = arith.constant 0 : index
        %52 = vector.load %arg5[%c3_36, %c0_37] : memref<4x32xf32, #tpu.memory_space<vmem>>, vector<1x32xf32>
        %53 = arith.mulf %40, %50 : vector<1x32xf32>
        %54 = arith.subf %52, %53 : vector<1x32xf32>
        %c3_38 = arith.constant 3 : index
        %c0_39 = arith.constant 0 : index
        %55 = vector.load %arg6[%c3_38, %c0_39] : memref<8x32xf32, #tpu.memory_space<vmem>>, vector<1x32xf32>
        tpu.vector_store %arg6[%c3_38, %c0_39], %54 {strides = array<i32>} : memref<8x32xf32, #tpu.memory_space<vmem>>, vector<1x32xf32>,
      } else {
      }
    } else {
    }
    return
  }
  func.func @transform_0(%arg0: i32, %arg1: i32) -> (i32, i32) {
    %c0_i32 = arith.constant 0 : i32
    %c0_i32_0 = arith.constant 0 : i32
    return %arg1, %c0_i32 : i32, i32
  }
  func.func @transform_1(%arg0: i32, %arg1: i32) -> (i32, i32) {
    %c0_i32 = arith.constant 0 : i32
    %c0_i32_0 = arith.constant 0 : i32
    %c0_i32_1 = arith.constant 0 : i32
    return %c0_i32, %c0_i32_0 : i32, i32
  }
  func.func @transform_2(%arg0: i32, %arg1: i32) -> (i32, i32) {
    %c0_i32 = arith.constant 0 : i32
    %c0_i32_0 = arith.constant 0 : i32
    %c0_i32_1 = arith.constant 0 : i32
    return %c0_i32, %c0_i32_0 : i32, i32
  }
  func.func @transform_3(%arg0: i32, %arg1: i32) -> (i32, i32) {
    %c0_i32 = arith.constant 0 : i32
    %c0_i32_0 = arith.constant 0 : i32
    %c0_i32_1 = arith.constant 0 : i32
    return %c0_i32, %c0_i32_0 : i32, i32
  }
  func.func @transform_4(%arg0: i32, %arg1: i32) -> (i32, i32) {
    %c0_i32 = arith.constant 0 : i32
    %c0_i32_0 = arith.constant 0 : i32
    %c0_i32_1 = arith.constant 0 : i32
    return %c0_i32, %c0_i32_0 : i32, i32
  }
}

</mosaic_0001>

<llo_original>
// kernel: tpu_custom_call.1
$region0: #{tpu_custom_call.1}
  #allocation0 [shape = 'u32[]', space=smem, size = 0x4, offset = 0x4, fixed_abs, tag = 'smem constant byte address 0x4 - core index']
  #allocation1 [shape = 'u32[144,128]{1,0:T(1,128)}', space=vmem, size = 0x12000, scoped, tag = 'internal scratch']
  #allocation2 [shape = 'f32[8,32]{1,0:T(8,128)}', space=vmem, size = 0x1000, scoped, tag = 'scratch operand']
  %s0 = inlined_call_operand.hbm [shape: f32[16,32], index: 0, kind: input, shape index: {}]
  %s1 = inlined_call_operand.hbm [shape: f32[32,32], index: 1, kind: input, shape index: {}]
  %s2 = inlined_call_operand.hbm [shape: f32[32,32], index: 2, kind: input, shape index: {}]
  %s3 = inlined_call_operand.vmem [shape: f32[4,32], index: 3, kind: input, shape index: {}]
  %s4 = inlined_call_operand.hbm [shape: f32[8,32], index: 4, kind: output, shape index: {}]
  %s5 = sld [smem:[#allocation0]]
  $region81: #{tpu_custom_call.1} parent=0
    _
  %s7 = ssub.s32 1, %s5
  %s8 = scalar_select 0, %s7, %s5
  $region1: #{tpu_custom_call.1} parent=0
    #allocation3 [shape = 'u8[8192]{0}', space=vmem, size = 0x2000, scoped, tag = 'input window, operand 0, single buffered']
    #allocation4 [shape = 's32[2]{0}', space=sflag, size = 0x8, scoped, tag = 'scoped memory for tpu_custom_call.1']
    #allocation5 [shape = 's32[2]{0}', space=sflag, size = 0x8, scoped, tag = 'scoped memory for tpu_custom_call.1']
    #allocation6 [shape = 'u8[16384]{0}', space=vmem, size = 0x4000, scoped, tag = 'input window, operand 1, single buffered']
    #allocation7 [shape = 's32[1]{0}', space=sflag, size = 0x4, scoped, tag = 'scoped memory for tpu_custom_call.1']
    #allocation8 [shape = 'u8[16384]{0}', space=vmem, size = 0x4000, scoped, tag = 'input window, operand 2, single buffered']
    #allocation9 [shape = 'u8[4096]{0}', space=vmem, size = 0x1000, scoped, tag = 'output window, operand 0, single buffered']
    %9 = vsyncpa [#allocation4], 0
    %10 = vsyncpa [#allocation7], 0
    %11 = vsyncpa [#allocation5], 0
    loop: start=0, step=1, limit=4
    $region2: #{tpu_custom_call.1} parent=1 // loop_pre_header
      _
    $region3: #{tpu_custom_call.1} parent=1 // loop_header
      %s13 = sphi 0, %s17
      %p14 = scmp.ge.s32.totalorder %s13, 4
      %s20 = sphi 0, %s32
      %s21 = sphi 0, %s28
      %s22 = sphi 0, %s20
      %s23 = sphi 0, %s21
      %s24 = sphi 0, %s22
      %s25 = sphi 0, %s23
      %s35 = sphi 0, %s37
      %s38 = sphi 0, %s35
      %s39 = sphi 0, %s38
      %s55 = sphi 0, %s39
      %s59 = sphi 0, %s59
      %s61 = sphi 0, %s59
      %s62 = sphi 0, %s61
      %s76 = sphi 0, %s62
      %s80 = sphi 0, %s80
      %s82 = sphi 0, %s80
      %s83 = sphi 0, %s82
      %s97 = sphi 0, %s83
      %s101 = sphi 0, %s101
      %s103 = sphi 0, %s101
      %s104 = sphi 0, %s103
      %s118 = sphi 0, %s104
      %s122 = sphi 0, %s122
      %s124 = sphi 0, %s122
      %s125 = sphi 0, %s124
      %s139 = sphi 0, %s125
    $region4: #{tpu_custom_call.1} parent=1 // loop_header_branch
      %16 = sbr.rel (%p14) target = $region8
    $region5: #{tpu_custom_call.1} parent=1 // loop_body
      %s18 = ssub.s32 %s13, 1
      %s19 = ssub.s32 %s13, 2
      %s26 = sadd.s32 1, %s21
      %p27 = scmp.ge.s32.totalorder %s26, 1
      %s28 = scalar_select %p27, 0, %s26
      %s29 = sadd.s32 1, %s20
      %s30 = scalar_select %p27, %s29, %s20
      %p31 = scmp.ge.s32.totalorder %s30, 2
      %s32 = scalar_select %p31, 0, %s30
      %s33 = ssub.s32 %s21, %s28
      %p34 = scmp.eq.s32.totalorder %s33, 0
      %s36 = sadd.s32 %s35, 1
      %s37 = scalar_select %p34, %s35, %s36
      %p40 = pneg %p34
      %p41 = scmp.eq.s32.totalorder %s13, 1
      %p42 = por %p40, %p41
      %p43 = scmp.ne.s32.totalorder %s35, %s38
      %p44 = scmp.eq.s32.totalorder %s13, 0
      %p45 = por %p43, %p44
      %p46 = scmp.ne.s32.totalorder %s35, %s38
      %p47 = scmp.eq.s32.totalorder %s18, 1
      %p48 = por %p46, %p47
      %p49 = scmp.ne.s32.totalorder %s38, %s39
      %p50 = scmp.eq.s32.totalorder %s18, 0
      %p51 = por %p49, %p50
      %p52 = scmp.ne.s32.totalorder %s38, %s39
      %p53 = scmp.eq.s32.totalorder %s19, 1
      %p54 = por %p52, %p53
      %p56 = scmp.ne.s32.totalorder %s39, %s55
      %p57 = scmp.eq.s32.totalorder %s19, 0
      %p58 = por %p56, %p57
      %s60 = sadd.s32 %s59, 1
      %p63 = scmp.eq.s32.totalorder %s13, 1
      %p64 = scmp.ne.s32.totalorder %s59, %s61
      %p65 = scmp.eq.s32.totalorder %s13, 0
      %p66 = por %p64, %p65
      %p67 = scmp.ne.s32.totalorder %s59, %s61
      %p68 = scmp.eq.s32.totalorder %s18, 1
      %p69 = por %p67, %p68
      %p70 = scmp.ne.s32.totalorder %s61, %s62
      %p71 = scmp.eq.s32.totalorder %s18, 0
      %p72 = por %p70, %p71
      %p73 = scmp.ne.s32.totalorder %s61, %s62
      %p74 = scmp.eq.s32.totalorder %s19, 1
      %p75 = por %p73, %p74
      %p77 = scmp.ne.s32.totalorder %s62, %s76
      %p78 = scmp.eq.s32.totalorder %s19, 0
      %p79 = por %p77, %p78
      %s81 = sadd.s32 %s80, 1
      %p84 = scmp.eq.s32.totalorder %s13, 1
      %p85 = scmp.ne.s32.totalorder %s80, %s82
      %p86 = scmp.eq.s32.totalorder %s13, 0
      %p87 = por %p85, %p86
      %p88 = scmp.ne.s32.totalorder %s80, %s82
      %p89 = scmp.eq.s32.totalorder %s18, 1
      %p90 = por %p88, %p89
      %p91 = scmp.ne.s32.totalorder %s82, %s83
      %p92 = scmp.eq.s32.totalorder %s18, 0
      %p93 = por %p91, %p92
      %p94 = scmp.ne.s32.totalorder %s82, %s83
      %p95 = scmp.eq.s32.totalorder %s19, 1
      %p96 = por %p94, %p95
      %p98 = scmp.ne.s32.totalorder %s83, %s97
      %p99 = scmp.eq.s32.totalorder %s19, 0
      %p100 = por %p98, %p99
      %s102 = sadd.s32 %s101, 1
      %p105 = scmp.eq.s32.totalorder %s13, 1
      %p106 = scmp.ne.s32.totalorder %s101, %s103
      %p107 = scmp.eq.s32.totalorder %s13, 0
      %p108 = por %p106, %p107
      %p109 = scmp.ne.s32.totalorder %s101, %s103
      %p110 = scmp.eq.s32.totalorder %s18, 1
      %p111 = por %p109, %p110
      %p112 = scmp.ne.s32.totalorder %s103, %s104
      %p113 = scmp.eq.s32.totalorder %s18, 0
      %p114 = por %p112, %p113
      %p115 = scmp.ne.s32.totalorder %s103, %s104
      %p116 = scmp.eq.s32.totalorder %s19, 1
      %p117 = por %p115, %p116
      %p119 = scmp.ne.s32.totalorder %s104, %s118
      %p120 = scmp.eq.s32.totalorder %s19, 0
      %p121 = por %p119, %p120
      %s123 = sadd.s32 %s122, 1
      %p126 = scmp.eq.s32.totalorder %s13, 1
      %p127 = scmp.ne.s32.totalorder %s122, %s124
      %p128 = scmp.eq.s32.totalorder %s13, 0
      %p129 = por %p127, %p128
      %p130 = scmp.ne.s32.totalorder %s122, %s124
      %p131 = scmp.eq.s32.totalorder %s18, 1
      %p132 = por %p130, %p131
      %p133 = scmp.ne.s32.totalorder %s124, %s125
      %p134 = scmp.eq.s32.totalorder %s18, 0
      %p135 = por %p133, %p134
      %p136 = scmp.ne.s32.totalorder %s124, %s125
      %p137 = scmp.eq.s32.totalorder %s19, 1
      %p138 = por %p136, %p137
      %p140 = scmp.ne.s32.totalorder %s125, %s139
      %p141 = scmp.eq.s32.totalorder %s19, 0
      %p142 = por %p140, %p141
      %p143 = scmp.le.s32.totalorder 1, %s13
      %p144 = scmp.lt.s32.totalorder %s13, 3
      %p145 = pnand %p143, %p144
      %p146 = pneg %p145
      // Predicated region
      $region9: #{tpu_custom_call.1} parent=5 // pred_check
        _
      $region10: #{tpu_custom_call.1} parent=5 // pred_check_branch
        %148 = sbr.rel (%p145) target = $region12
      $region11: #{tpu_custom_call.1} parent=5 // pred_region
        %s149 = ssub.s32 %s13, 1
        // Predicated region
        $region13: #{tpu_custom_call.1} parent=11 // pred_check
          %p150 = pneg %p51
        $region14: #{tpu_custom_call.1} parent=11 // pred_check_branch
          %152 = sbr.rel (%p150) target = $region16
        $region15: #{tpu_custom_call.1} parent=11 // pred_region
          %s153 = smul.u32 2, %s23
          %s155 = ssub.s32 256, 256
          %156 = vsyncadd [#allocation4], %s155
          %s157 = smul.addr %s153, 128
          %s158 = scalar_lea.hbm %s0, %s157
          %s159 = sshll.u32 [#allocation3], 4
          %s160 = int_to_ptr.vmem [resolvable:$true] %s159
          %165 = dma.hbm_to_vmem [thread:$0]  %s158, 256, %s160, [#allocation4], 128, 128, 8
        $region16: #{tpu_custom_call.1} parent=11 // pred_fallthru
          _
        // Predicated region
        $region17: #{tpu_custom_call.1} parent=11 // pred_check
          %p166 = pneg %p72
        $region18: #{tpu_custom_call.1} parent=11 // pred_check_branch
          %168 = sbr.rel (%p166) target = $region20
        $region19: #{tpu_custom_call.1} parent=11 // pred_region
          %s170 = ssub.s32 512, 512
          %171 = vsyncadd [#allocation7], %s170
          %s172 = sshll.u32 [#allocation6], 4
          %s173 = int_to_ptr.vmem [resolvable:$true] %s172
          %178 = dma.hbm_to_vmem [thread:$0]  %s1, 512, %s173, [#allocation7], 128, 128, 8
        $region20: #{tpu_custom_call.1} parent=11 // pred_fallthru
          _
        // Predicated region
        $region21: #{tpu_custom_call.1} parent=11 // pred_check
          %p179 = pneg %p93
        $region22: #{tpu_custom_call.1} parent=11 // pred_check_branch
          %181 = sbr.rel (%p179) target = $region24
        $region23: #{tpu_custom_call.1} parent=11 // pred_region
          %s183 = ssub.s32 512, 512
          %184 = vsyncadd [#allocation7], %s183
          %s185 = sshll.u32 [#allocation8], 4
          %s186 = int_to_ptr.vmem [resolvable:$true] %s185
          %191 = dma.hbm_to_vmem [thread:$0]  %s2, 512, %s186, [#allocation7], 128, 128, 8
        $region24: #{tpu_custom_call.1} parent=11 // pred_fallthru
          _
        // Predicated region
        $region25: #{tpu_custom_call.1} parent=11 // pred_check
          %p192 = pneg %p114
        $region26: #{tpu_custom_call.1} parent=11 // pred_check_branch
          %194 = sbr.rel (%p192) target = $region28
        $region27: #{tpu_custom_call.1} parent=11 // pred_region
          _
        $region28: #{tpu_custom_call.1} parent=11 // pred_fallthru
          _
      $region12: #{tpu_custom_call.1} parent=5 // pred_fallthru
        _
      %p195 = scmp.lt.s32.totalorder %s13, 2
      // Predicated region
      $region29: #{tpu_custom_call.1} parent=5 // pred_check
        %p196 = pneg %p195
      $region30: #{tpu_custom_call.1} parent=5 // pred_check_branch
        %198 = sbr.rel (%p196) target = $region32
      $region31: #{tpu_custom_call.1} parent=5 // pred_region
        _
      $region32: #{tpu_custom_call.1} parent=5 // pred_fallthru
        _
      %p199 = scmp.le.s32.totalorder 1, %s13
      %p200 = scmp.lt.s32.totalorder %s13, 3
      %p201 = pnand %p199, %p200
      %p202 = pneg %p201
      // Predicated region
      $region33: #{tpu_custom_call.1} parent=5 // pred_check
        _
      $region34: #{tpu_custom_call.1} parent=5 // pred_check_branch
        %204 = sbr.rel (%p201) target = $region36
      $region35: #{tpu_custom_call.1} parent=5 // pred_region
        %s205 = ssub.s32 %s13, 1
        // Predicated region
        $region37: #{tpu_custom_call.1} parent=35 // pred_check
          %p206 = pneg %p51
        $region38: #{tpu_custom_call.1} parent=35 // pred_check_branch
          %208 = sbr.rel (%p206) target = $region40
        $region39: #{tpu_custom_call.1} parent=35 // pred_region
          %209 = dma.done [#allocation4], 256
        $region40: #{tpu_custom_call.1} parent=35 // pred_fallthru
          _
        // Predicated region
        $region41: #{tpu_custom_call.1} parent=35 // pred_check
          %p210 = pneg %p72
        $region42: #{tpu_custom_call.1} parent=35 // pred_check_branch
          %212 = sbr.rel (%p210) target = $region44
        $region43: #{tpu_custom_call.1} parent=35 // pred_region
          %213 = dma.done [#allocation7], 512
        $region44: #{tpu_custom_call.1} parent=35 // pred_fallthru
          _
        // Predicated region
        $region45: #{tpu_custom_call.1} parent=35 // pred_check
          %p214 = pneg %p93
        $region46: #{tpu_custom_call.1} parent=35 // pred_check_branch
          %216 = sbr.rel (%p214) target = $region48
        $region47: #{tpu_custom_call.1} parent=35 // pred_region
          %217 = dma.done [#allocation7], 512
        $region48: #{tpu_custom_call.1} parent=35 // pred_fallthru
          _
        %p218 = pneg %p51
        %p219 = pneg %p48
        %p220 = pneg %p72
        %p221 = pneg %p69
        %p222 = pneg %p93
        %p223 = pneg %p90
        %p224 = pneg %p114
        %p225 = pneg %p111
        %p226 = pneg %p135
        %p227 = pneg %p132
        %s228 = smul.u32 2, %s23
        %p229 = scmp.eq.s32.totalorder %s22, 0
        %p230 = scmp.eq.s32.totalorder %s23, 0
        %p231 = pnand %p229, %p230
        %p232 = pneg %p231
        // Predicated region
        $region49: #{tpu_custom_call.1} parent=35 // pred_check
          _
        $region50: #{tpu_custom_call.1} parent=35 // pred_check_branch
          %234 = sbr.rel (%p231) target = $region52
        $region51: #{tpu_custom_call.1} parent=35 // pred_region
          %vm235 = vcmask 261120
          %236 = vst.msk [vmem:[#allocation2] sm:$0xff] %vm235, 0.0
          %237 = vst.msk [vmem:[#allocation9] sm:$0xff] %vm235, 0.0
        $region52: #{tpu_custom_call.1} parent=35 // pred_fallthru
          _
        %v238 = vld [vmem:[#allocation3] sm:$0xff]
        %v239 = vld [vmem:[#allocation3 + $0x8] sm:$0xff]
        %v240 = vld [vmem:[#allocation6] sm:$0xff]
        %v241 = vld [vmem:[#allocation6 + $0x8] sm:$0xff]
        %v242 = vld [vmem:[#allocation6 + $0x10] sm:$0xff]
        %v243 = vld [vmem:[#allocation6 + $0x18] sm:$0xff]
        %vm244 = vcmask 261120
        %v246 = vsel %vm244, %v238, 0
        %v249 = vsel %vm244, %v239, 0
        %251 = vmatprep.subr.mxu0 0.0
        %252 = vmatpush1.msra.mxu0 %v240
        %253 = vmatprep.subr.mxu0 0.0
        %254 = vmatpush1.msra.mxu0 %v241
        %255 = vmatprep.subr.mxu0 0.0
        %256 = vmatpush1.msra.mxu0 %v242
        %257 = vmatprep.subr.mxu0 0.0
        %258 = vmatpush1.msra.mxu0 %v243
        %259 = vmatprep.subr.mxu0 0.0
        %260 = vmatpush1.msra.mxu0 0.0
        %261 = vmatprep.subr.mxu0 0.0
        %262 = vmatpush1.msra.mxu0 0.0
        %263 = vmatprep.subr.mxu0 0.0
        %264 = vmatpush1.msra.mxu0 0.0
        %265 = vmatprep.subr.mxu0 0.0
        %266 = vmatpush1.msra.mxu0 0.0
        %267 = vmatprep.subr.mxu0 0.0
        %268 = vmatpush1.msra.mxu0 0.0
        %269 = vmatprep.subr.mxu0 0.0
        %270 = vmatpush1.msra.mxu0 0.0
        %271 = vmatprep.subr.mxu0 0.0
        %272 = vmatpush1.msra.mxu0 0.0
        %273 = vmatprep.subr.mxu0 0.0
        %274 = vmatpush1.msra.mxu0 0.0
        %275 = vmatprep.subr.mxu0 0.0
        %276 = vmatpush1.msra.mxu0 0.0
        %277 = vmatprep.subr.mxu0 0.0
        %278 = vmatpush1.msra.mxu0 0.0
        %279 = vmatprep.subr.mxu0 0.0
        %280 = vmatpush1.msra.mxu0 0.0
        %281 = vmatprep.subr.mxu0 0.0
        %282 = vmatpush1.msra.mxu0 0.0
        %283 = vmatprep.subr.mxu0 0.0
        %284 = vmatpush1.msra.mxu0 0.0
        %285 = vmatprep.subr.mxu0 0.0
        %286 = vmatpush1.msra.mxu0 0.0
        %287 = vmatprep.subr.mxu0 0.0
        %288 = vmatpush1.msra.mxu0 0.0
        %289 = vmatprep.subr.mxu0 0.0
        %290 = vmatpush1.msra.mxu0 0.0
        %291 = vmatprep.subr.mxu0 0.0
        %292 = vmatpush1.msra.mxu0 0.0
        %293 = vmatprep.subr.mxu0 0.0
        %294 = vmatpush1.msra.mxu0 0.0
        %295 = vmatprep.subr.mxu0 0.0
        %296 = vmatpush1.msra.mxu0 0.0
        %297 = vmatprep.subr.mxu0 0.0
        %298 = vmatpush1.msra.mxu0 0.0
        %299 = vmatprep.subr.mxu0 0.0
        %300 = vmatpush1.msra.mxu0 0.0
        %301 = vmatprep.subr.mxu0 0.0
        %302 = vmatpush1.msra.mxu0 0.0
        %303 = vmatprep.subr.mxu0 0.0
        %304 = vmatpush1.msra.mxu0 0.0
        %305 = vmatprep.subr.mxu0 0.0
        %306 = vmatpush1.msra.mxu0 0.0
        %307 = vmatprep.subr.mxu0 0.0
        %308 = vmatpush1.msra.mxu0 0.0
        %309 = vmatprep.subr.mxu0 0.0
        %310 = vmatpush1.msra.mxu0 0.0
        %311 = vmatprep.subr.mxu0 0.0
        %312 = vmatpush1.msra.mxu0 0.0
        %313 = vmatprep.subr.mxu0 0.0
        %314 = vmatpush1.msra.mxu0 0.0
        %315 = vmatprep.mubr.f32.mxu0 0.0
        %316 = vmatmul.mubr.f32.gmra.mrb[0].mxu0 %v246
        %v317 = vpop.f32.mrb[0].mxu0
        %v318 = vadd.f32 0.0, %v317
        %v319 = vpop.f32.mrb[0].mxu0
        %320 = vmatprep.mubr.f32.mxu0 0.0
        %321 = vmatmul.mubr.f32.gmra.mrb[0].mxu0 %v249
        %v322 = vpop.f32.mrb[0].mxu0
        %v323 = vadd.f32 0.0, %v322
        %v324 = vpop.f32.mrb[0].mxu0
        %325 = vdwg.mxu0
        // Predicated region
        $region53: #{tpu_custom_call.1} parent=35 // pred_check
          %p326 = pneg %p229
        $region54: #{tpu_custom_call.1} parent=35 // pred_check_branch
          %328 = sbr.rel (%p326) target = $region56
        $region55: #{tpu_custom_call.1} parent=35 // pred_region
          %v329 = vld [vmem:[#allocation2] sm:$0x1]
          %v330 = vsel %vm244, %v318, 0.0
          %v331 = vsel %vm244, %v323, 0.0
          %v332 = vadd.f32 %v330, %v331
          %v333 = vrot.slane %v332, 4
          %v334 = vadd.f32 %v332, %v333
          %v335 = vrot.slane %v334, 2
          %v336 = vadd.f32 %v334, %v335
          %v337 = vrot.slane %v336, 1
          %v338 = vadd.f32 %v336, %v337
          %v339 = vadd.f32 %v329, %v338
          %vm340 = vcmask 253952
          %341 = vst.msk [vmem:[#allocation2] sm:$0x1] %vm340, %v339
          %v342 = vld [vmem:[#allocation2 + $0x1] sm:$0x1]
          %v343 = vmul.f32 %v318, %v318
          %v344 = vmul.f32 %v323, %v323
          %v345 = vsel %vm244, %v343, 0.0
          %v346 = vsel %vm244, %v344, 0.0
          %v347 = vadd.f32 %v345, %v346
          %v348 = vrot.slane %v347, 4
          %v349 = vadd.f32 %v347, %v348
          %v350 = vrot.slane %v349, 2
          %v351 = vadd.f32 %v349, %v350
          %v352 = vrot.slane %v351, 1
          %v353 = vadd.f32 %v351, %v352
          %v354 = vadd.f32 %v342, %v353
          %355 = vst.msk [vmem:[#allocation2 + $0x1] sm:$0x1] %vm340, %v354
          // Predicated region
          $region57: #{tpu_custom_call.1} parent=55 // pred_check
            %p356 = pneg %p230
          $region58: #{tpu_custom_call.1} parent=55 // pred_check_branch
            %358 = sbr.rel (%p356) target = $region60
          $region59: #{tpu_custom_call.1} parent=55 // pred_region
            %v359 = vld [vmem:[#allocation2] sm:$0x1]
            %v360 = vmul.f32 %v359, 0.0625
            %v361 = vld [vmem:[#allocation2 + $0x1] sm:$0x1]
            %v362 = vmul.f32 %v361, 0.0625
            %v363 = vmul.f32 %v360, %v360
            %v364 = vsub.f32 %v362, %v363
            %v365 = vadd.f32 %v364, 1e-05
            %v366 = vrsqrt.pop %v365
            %v367 = vld [vmem:[%s3] sm:$0x1]
            %v368 = vmul.f32 %v366, %v367
            %369 = vst.msk [vmem:[#allocation9] sm:$0x1] %vm340, %v368
            %v370 = vld [vmem:[%s3 + $0x1] sm:$0x1]
            %v371 = vmul.f32 %v360, %v368
            %v372 = vsub.f32 %v370, %v371
            %373 = vst.msk [vmem:[#allocation9 + $0x1] sm:$0x1] %vm340, %v372
          $region60: #{tpu_custom_call.1} parent=55 // pred_fallthru
            _
        $region56: #{tpu_custom_call.1} parent=35 // pred_fallthru
          _
        %p374 = scmp.eq.s32.totalorder %s22, 1
        // Predicated region
        $region61: #{tpu_custom_call.1} parent=35 // pred_check
          %p375 = pneg %p374
        $region62: #{tpu_custom_call.1} parent=35 // pred_check_branch
          %377 = sbr.rel (%p375) target = $region64
        $region63: #{tpu_custom_call.1} parent=35 // pred_region
          %v378 = vld [vmem:[#allocation9] sm:$0x1]
          %v379 = vlaneseq
          %v380 = vshrl.u32 %v379, 7
          %v381 = vsub.s32 0, %v380
          %v382 = vrot.slane %v378, %v381
          %v383 = vmul.f32 %v318, %v382
          %v384 = vmul.f32 %v323, %v382
          %v385 = vld [vmem:[#allocation9 + $0x1] sm:$0x1]
          %v386 = vlaneseq
          %v387 = vshrl.u32 %v386, 7
          %v388 = vsub.s32 0, %v387
          %v389 = vrot.slane %v385, %v388
          %v390 = vadd.f32 %v383, %v389
          %v391 = vadd.f32 %v384, %v389
          %v392 = vmax.f32 %v390, 0.0
          %v393 = vmax.f32 %v391, 0.0
          %v394 = vld [vmem:[#allocation8] sm:$0xff]
          %v395 = vld [vmem:[#allocation8 + $0x8] sm:$0xff]
          %v396 = vld [vmem:[#allocation8 + $0x10] sm:$0xff]
          %v397 = vld [vmem:[#allocation8 + $0x18] sm:$0xff]
          %v399 = vsel %vm244, %v392, 0
          %v402 = vsel %vm244, %v393, 0
          %404 = vmatprep.subr.mxu0 0.0
          %405 = vmatpush1.msra.mxu0 %v394
          %406 = vmatprep.subr.mxu0 0.0
          %407 = vmatpush1.msra.mxu0 %v395
          %408 = vmatprep.subr.mxu0 0.0
          %409 = vmatpush1.msra.mxu0 %v396
          %410 = vmatprep.subr.mxu0 0.0
          %411 = vmatpush1.msra.mxu0 %v397
          %412 = vmatprep.subr.mxu0 0.0
          %413 = vmatpush1.msra.mxu0 0.0
          %414 = vmatprep.subr.mxu0 0.0
          %415 = vmatpush1.msra.mxu0 0.0
          %416 = vmatprep.subr.mxu0 0.0
          %417 = vmatpush1.msra.mxu0 0.0
          %418 = vmatprep.subr.mxu0 0.0
          %419 = vmatpush1.msra.mxu0 0.0
          %420 = vmatprep.subr.mxu0 0.0
          %421 = vmatpush1.msra.mxu0 0.0
          %422 = vmatprep.subr.mxu0 0.0
          %423 = vmatpush1.msra.mxu0 0.0
          %424 = vmatprep.subr.mxu0 0.0
          %425 = vmatpush1.msra.mxu0 0.0
          %426 = vmatprep.subr.mxu0 0.0
          %427 = vmatpush1.msra.mxu0 0.0
          %428 = vmatprep.subr.mxu0 0.0
          %429 = vmatpush1.msra.mxu0 0.0
          %430 = vmatprep.subr.mxu0 0.0
          %431 = vmatpush1.msra.mxu0 0.0
          %432 = vmatprep.subr.mxu0 0.0
          %433 = vmatpush1.msra.mxu0 0.0
          %434 = vmatprep.subr.mxu0 0.0
          %435 = vmatpush1.msra.mxu0 0.0
          %436 = vmatprep.subr.mxu0 0.0
          %437 = vmatpush1.msra.mxu0 0.0
          %438 = vmatprep.subr.mxu0 0.0
          %439 = vmatpush1.msra.mxu0 0.0
          %440 = vmatprep.subr.mxu0 0.0
          %441 = vmatpush1.msra.mxu0 0.0
          %442 = vmatprep.subr.mxu0 0.0
          %443 = vmatpush1.msra.mxu0 0.0
          %444 = vmatprep.subr.mxu0 0.0
          %445 = vmatpush1.msra.mxu0 0.0
          %446 = vmatprep.subr.mxu0 0.0
          %447 = vmatpush1.msra.mxu0 0.0
          %448 = vmatprep.subr.mxu0 0.0
          %449 = vmatpush1.msra.mxu0 0.0
          %450 = vmatprep.subr.mxu0 0.0
          %451 = vmatpush1.msra.mxu0 0.0
          %452 = vmatprep.subr.mxu0 0.0
          %453 = vmatpush1.msra.mxu0 0.0
          %454 = vmatprep.subr.mxu0 0.0
          %455 = vmatpush1.msra.mxu0 0.0
          %456 = vmatprep.subr.mxu0 0.0
          %457 = vmatpush1.msra.mxu0 0.0
          %458 = vmatprep.subr.mxu0 0.0
          %459 = vmatpush1.msra.mxu0 0.0
          %460 = vmatprep.subr.mxu0 0.0
          %461 = vmatpush1.msra.mxu0 0.0
          %462 = vmatprep.subr.mxu0 0.0
          %463 = vmatpush1.msra.mxu0 0.0
          %464 = vmatprep.subr.mxu0 0.0
          %465 = vmatpush1.msra.mxu0 0.0
          %466 = vmatprep.subr.mxu0 0.0
          %467 = vmatpush1.msra.mxu0 0.0
          %468 = vmatprep.mubr.f32.mxu0 0.0
          %469 = vmatmul.mubr.f32.gmra.mrb[0].mxu0 %v399
          %v470 = vpop.f32.mrb[0].mxu0
          %v471 = vadd.f32 0.0, %v470
          %v472 = vpop.f32.mrb[0].mxu0
          %473 = vmatprep.mubr.f32.mxu0 0.0
          %474 = vmatmul.mubr.f32.gmra.mrb[0].mxu0 %v402
          %v475 = vpop.f32.mrb[0].mxu0
          %v476 = vadd.f32 0.0, %v475
          %v477 = vpop.f32.mrb[0].mxu0
          %478 = vdwg.mxu0
          %v479 = vld [vmem:[#allocation2 + $0x2] sm:$0x1]
          %v480 = vsel %vm244, %v471, 0.0
          %v481 = vsel %vm244, %v476, 0.0
          %v482 = vadd.f32 %v480, %v481
          %v483 = vrot.slane %v482, 4
          %v484 = vadd.f32 %v482, %v483
          %v485 = vrot.slane %v484, 2
          %v486 = vadd.f32 %v484, %v485
          %v487 = vrot.slane %v486, 1
          %v488 = vadd.f32 %v486, %v487
          %v489 = vadd.f32 %v479, %v488
          %vm490 = vcmask 253952
          %491 = vst.msk [vmem:[#allocation2 + $0x2] sm:$0x1] %vm490, %v489
          %v492 = vld [vmem:[#allocation2 + $0x3] sm:$0x1]
          %v493 = vmul.f32 %v471, %v471
          %v494 = vmul.f32 %v476, %v476
          %v495 = vsel %vm244, %v493, 0.0
          %v496 = vsel %vm244, %v494, 0.0
          %v497 = vadd.f32 %v495, %v496
          %v498 = vrot.slane %v497, 4
          %v499 = vadd.f32 %v497, %v498
          %v500 = vrot.slane %v499, 2
          %v501 = vadd.f32 %v499, %v500
          %v502 = vrot.slane %v501, 1
          %v503 = vadd.f32 %v501, %v502
          %v504 = vadd.f32 %v492, %v503
          %505 = vst.msk [vmem:[#allocation2 + $0x3] sm:$0x1] %vm490, %v504
          // Predicated region
          $region65: #{tpu_custom_call.1} parent=63 // pred_check
            %p506 = pneg %p230
          $region66: #{tpu_custom_call.1} parent=63 // pred_check_branch
            %508 = sbr.rel (%p506) target = $region68
          $region67: #{tpu_custom_call.1} parent=63 // pred_region
            %v509 = vld [vmem:[#allocation2 + $0x2] sm:$0x1]
            %v510 = vmul.f32 %v509, 0.0625
            %v511 = vld [vmem:[#allocation2 + $0x3] sm:$0x1]
            %v512 = vmul.f32 %v511, 0.0625
            %v513 = vmul.f32 %v510, %v510
            %v514 = vsub.f32 %v512, %v513
            %v515 = vadd.f32 %v514, 1e-05
            %v516 = vrsqrt.pop %v515
            %v517 = vld [vmem:[%s3 + $0x2] sm:$0x1]
            %v518 = vmul.f32 %v516, %v517
            %519 = vst.msk [vmem:[#allocation9 + $0x2] sm:$0x1] %vm490, %v518
            %v520 = vld [vmem:[%s3 + $0x3] sm:$0x1]
            %v521 = vmul.f32 %v510, %v518
            %v522 = vsub.f32 %v520, %v521
            %523 = vst.msk [vmem:[#allocation9 + $0x3] sm:$0x1] %vm490, %v522
          $region68: #{tpu_custom_call.1} parent=63 // pred_fallthru
            _
        $region64: #{tpu_custom_call.1} parent=35 // pred_fallthru
          _
        // Predicated region
        $region69: #{tpu_custom_call.1} parent=35 // pred_check
          %p524 = pneg %p132
        $region70: #{tpu_custom_call.1} parent=35 // pred_check_branch
          %526 = sbr.rel (%p524) target = $region72
        $region71: #{tpu_custom_call.1} parent=35 // pred_region
          %s528 = ssub.s32 128, 128
          %529 = vsyncadd [#allocation5], %s528
          %s531 = sshll.u32 [#allocation9], 4
          %s532 = int_to_ptr.vmem [resolvable:$true] %s531
          %534 = dma.vmem_to_hbm [thread:$0]  %s532, 128, %s4, [#allocation5]
        $region72: #{tpu_custom_call.1} parent=35 // pred_fallthru
          _
        // Predicated region
        $region73: #{tpu_custom_call.1} parent=35 // pred_check
          %p535 = pneg %p132
        $region74: #{tpu_custom_call.1} parent=35 // pred_check_branch
          %537 = sbr.rel (%p535) target = $region76
        $region75: #{tpu_custom_call.1} parent=35 // pred_region
          %538 = dma.done [#allocation5], 128
        $region76: #{tpu_custom_call.1} parent=35 // pred_fallthru
          _
      $region36: #{tpu_custom_call.1} parent=5 // pred_fallthru
        _
      %p539 = scmp.le.s32.totalorder 2, %s13
      // Predicated region
      $region77: #{tpu_custom_call.1} parent=5 // pred_check
        %p540 = pneg %p539
      $region78: #{tpu_custom_call.1} parent=5 // pred_check_branch
        %542 = sbr.rel (%p540) target = $region80
      $region79: #{tpu_custom_call.1} parent=5 // pred_region
        %s543 = ssub.s32 %s13, 2
      $region80: #{tpu_custom_call.1} parent=5 // pred_fallthru
        _
    $region6: #{tpu_custom_call.1} parent=1 // loop_footer
      %s17 = sadd.s32 1, %s13
    $region7: #{tpu_custom_call.1} parent=1 // loop_footer_branch
      %12 = sbr.rel target = $region3
    $region8: #{tpu_custom_call.1} parent=1 // loop_exit
      _
    %544 = vsyncpa [#allocation4], 1
    %s545 = scalar_lea.sflag [#allocation4], 1
    %546 = vsyncpa %s545, 1
    %547 = vsyncpa [#allocation7], 1
    %548 = vsyncpa [#allocation5], 1
    %s549 = scalar_lea.sflag [#allocation5], 1
    %550 = vsyncpa %s549, 1

</llo_original>
